<compile_context>
chip_gen: v5e
topology: v5e:2x2
jax: 0.10.0
libtpu: 0.0.40
codegen_flags: <defaults>
</compile_context>

<pallas_src>
import functools

import jax
import jax.numpy as jnp
from jax.experimental import pallas as pl
from jax.experimental.pallas import tpu as pltpu


HIDDEN = 128                          # fixed by the PyTorch module
LANE = 128                            # TPU lane width (weight-side pad only)
MIN_TILE_B = 256                      # below this, a single batch tile
MAX_TILE_B = 2048                     # perf-review sweep target (mult. of 16)
VMEM_DATA_BUDGET = 12 * 1024 * 1024   # cap for per-tile activation buffers
VMEM_LIMIT_BYTES = 32 * 1024 * 1024   # explicit scoped-VMEM limit (all gens)


def _round_up(n, m):
    return ((n + m - 1) // m) * m


def _cdiv(a, b):
    return -(-a // b)


def _choose_tile_b(batch, num_features, x_itemsize):
    """Pick the batch tile size.

    Big enough to amortize the ~0.35 us/grid-step pipeline overhead, small
    enough that double-buffered x tiles + ~4 live (tile,128) f32 intermediates
    stay under a conservative VMEM budget (safe for v5e's 16 MiB default and
    v7x's 64 MiB physical), and split into >=2 grid steps for large batches so
    dimension_semantics=("parallel",) can feed both v7x TensorCores.
    """
    b16 = _round_up(batch, 16)            # 16: bf16 sublane packing
    if b16 <= MIN_TILE_B:
        return b16                        # tiny action-selection batches
    per_row = 2 * num_features * x_itemsize + 4 * HIDDEN * 4
    vmem_rows = max(16, (VMEM_DATA_BUDGET // per_row) // 16 * 16)
    max_tile = min(MAX_TILE_B, vmem_rows)
    n_tiles = max(2, _cdiv(b16, max_tile))
    return _round_up(_cdiv(b16, n_tiles), 16)


def _mlp_kernel(x_ref, w1_ref, b1_ref, w2_ref, b2_ref,
                w3_ref, b3_ref, w4_ref, b4_ref, o_ref):
    """Fused 4-layer MLP on one batch tile; weights/biases are VMEM-resident."""
    # bf16 matmul operands (MXU fast path), f32 accumulation + epilogue.
    h = jnp.dot(x_ref[...].astype(jnp.bfloat16), w1_ref[...],
                preferred_element_type=jnp.float32) + b1_ref[...]
    h = jnp.maximum(h, 0.0)

    h = jnp.dot(h.astype(jnp.bfloat16), w2_ref[...],
                preferred_element_type=jnp.float32) + b2_ref[...]
    h = jnp.maximum(h, 0.0)

    h = jnp.dot(h.astype(jnp.bfloat16), w3_ref[...],
                preferred_element_type=jnp.float32) + b3_ref[...]
    h = jnp.maximum(h, 0.0)

    o = jnp.dot(h.astype(jnp.bfloat16), w4_ref[...],
                preferred_element_type=jnp.float32) + b4_ref[...]
    # w4/b4 are zero-padded to 128 lanes (MXU-native matmul); store only the
    # real num_actions columns so the HBM output stays unpadded.
    o_ref[...] = o[:, :o_ref.shape[1]].astype(o_ref.dtype)


@functools.partial(jax.jit, static_argnames=("num_actions",))
def agent_forward(x, kernel_params, *, num_actions):
    """Agent MLP forward via one fused, batch-tiled Pallas kernel.

    x:             (B, num_state_features), float32 or bfloat16
    kernel_params: tuple from prepare_agent_params() (call it ONCE, outside
                   the hot path)
    Returns (B, num_actions) float32 Q-values.
    """
    B, F = x.shape
    tile_b = _choose_tile_b(B, F, x.dtype.itemsize)
    b_pad = _round_up(B, tile_b)
    grid = (b_pad // tile_b,)

    x_p = x if b_pad == B else jnp.pad(x, ((0, b_pad - B), (0, 0)))

    def _resident_spec(arr):
        # Full-array block, same block every grid step -> stays in VMEM.
        return pl.BlockSpec(arr.shape, lambda i: (0, 0))

    in_specs = ([pl.BlockSpec((tile_b, F), lambda i: (i, 0))]
                + [_resident_spec(a) for a in kernel_params])
    out_spec = pl.BlockSpec((tile_b, num_actions), lambda i: (i, 0))

    out = pl.pallas_call(
        _mlp_kernel,
        out_shape=jax.ShapeDtypeStruct((b_pad, num_actions), jnp.float32),
        grid=grid,
        in_specs=in_specs,
        out_specs=out_spec,
        compiler_params=pltpu.CompilerParams(
            dimension_semantics=("parallel",),      # megacore sharding on v7x
            vmem_limit_bytes=VMEM_LIMIT_BYTES),
    )(x_p, *kernel_params)

    return out if b_pad == B else out[:B]


def prepare_agent_params(params):
    """One-time conversion of Agent params into kernel-ready operands.

    `params` must use (in, out) weight layout and (1, out) biases (use
    params_from_pytorch() to convert a raw PyTorch state_dict layout).
    Weights are cast to bf16 (MXU fast path; ~8 fewer mantissa bits than the
    f32 PyTorch Linear -- fine for Q-value argmax), biases stay f32, and the
    last layer is zero-padded to 128 output lanes so every matmul is
    MXU-native.  Returns (kernel_params_tuple, num_actions).
    """
    w1 = jnp.asarray(params["w1"]); b1 = jnp.asarray(params["b1"])
    w2 = jnp.asarray(params["w2"]); b2 = jnp.asarray(params["b2"])
    w3 = jnp.asarray(params["w3"]); b3 = jnp.asarray(params["b3"])
    w4 = jnp.asarray(params["w4"]); b4 = jnp.asarray(params["b4"])

    num_actions = int(w4.shape[1])
    # Explicit layout checks (a transposed PyTorch checkpoint would otherwise
    # silently give wrong results for the square 128x128 layers).
    if (w1.ndim != 2 or w1.shape[1] != HIDDEN
            or w2.shape != (HIDDEN, HIDDEN) or w3.shape != (HIDDEN, HIDDEN)
            or w4.shape[0] != HIDDEN):
        raise ValueError("weights must be in (in, out) layout with hidden=128; "
                         "use params_from_pytorch() for PyTorch (out, in) tensors")
    for b, width in ((b1, HIDDEN), (b2, HIDDEN), (b3, HIDDEN), (b4, num_actions)):
        if tuple(b.shape) != (1, width):
            raise ValueError("biases must have shape (1, out)")

    a_pad = _round_up(num_actions, LANE)
    w4p = jnp.pad(w4, ((0, 0), (0, a_pad - num_actions)))
    b4p = jnp.pad(b4, ((0, 0), (0, a_pad - num_actions)))

    kernel_params = (
        w1.astype(jnp.bfloat16), b1.astype(jnp.float32),
        w2.astype(jnp.bfloat16), b2.astype(jnp.float32),
        w3.astype(jnp.bfloat16), b3.astype(jnp.float32),
        w4p.astype(jnp.bfloat16), b4p.astype(jnp.float32),
    )
    return kernel_params, num_actions


def params_from_pytorch(weights, biases):
    """Convert PyTorch nn.Linear tensors -- (out, in) weights and (out,)
    biases, given as numpy/JAX arrays in layer order -- to the (in, out) /
    (1, out) layout expected by prepare_agent_params()."""
    assert len(weights) == 4 and len(biases) == 4
    params = {}
    for i, (w, b) in enumerate(zip(weights, biases), start=1):
        params[f"w{i}"] = jnp.asarray(w).T
        params[f"b{i}"] = jnp.asarray(b).reshape(1, -1)
    return params


def init_agent_params(key, num_state_features, num_actions, hidden=HIDDEN,
                      dtype=jnp.float32):
    """Deterministic init mimicking nn.Linear's default U(-1/sqrt(fan_in), +)."""
    dims = [(num_state_features, hidden),
            (hidden, hidden),
            (hidden, hidden),
            (hidden, num_actions)]
    params = {}
    for i, (fan_in, fan_out) in enumerate(dims, start=1):
        key, kw, kb = jax.random.split(key, 3)
        bound = 1.0 / jnp.sqrt(float(fan_in))
        # Stored as (in, out) -- transpose of the PyTorch (out, in) layout.
        params[f"w{i}"] = jax.random.uniform(
            kw, (fan_in, fan_out), dtype=dtype, minval=-bound, maxval=bound)
        params[f"b{i}"] = jax.random.uniform(
            kb, (1, fan_out), dtype=dtype, minval=-bound, maxval=bound)
    return params


def _reference_forward(x, params):
    """Pure-JAX reference mirroring the kernel math (bf16 operands, f32 acc)."""
    def layer(h, w, b, relu):
        y = jnp.dot(h.astype(jnp.bfloat16), w.astype(jnp.bfloat16),
                    preferred_element_type=jnp.float32) + b.astype(jnp.float32)
        return jnp.maximum(y, 0.0) if relu else y
    h = layer(x, params["w1"], params["b1"], True)
    h = layer(h, params["w2"], params["b2"], True)
    h = layer(h, params["w3"], params["b3"], True)
    return layer(h, params["w4"], params["b4"], False)


# TODO(synk): replay-buffer bookkeeping / optimize() in the PyTorch class are
# host-side training utilities, not part of the forward pass; not ported.


if __name__ == "__main__":
    num_state_features = 32
    num_actions = 4

    key = jax.random.PRNGKey(0)
    key, kx1, kx2 = jax.random.split(key, 3)
    params = init_agent_params(key, num_state_features, num_actions)
    kernel_params, A = prepare_agent_params(params)   # one-time prep

    # 1) Small action-selection batch (single tile, grid=(1,)).
    x_small = jax.random.normal(kx1, (8, num_state_features), dtype=jnp.float32)
    out_small = jax.block_until_ready(
        agent_forward(x_small, kernel_params, num_actions=A))
    ref_small = _reference_forward(x_small, params)
    assert out_small.shape == (8, num_actions)
    assert jnp.allclose(out_small, ref_small, atol=1e-3, rtol=1e-3), (
        f"small-batch max abs err = {jnp.max(jnp.abs(out_small - ref_small))}")

    # 2) Larger batch exercising the multi-tile (>=2 grid steps) + padding path.
    x_big = jax.random.normal(kx2, (300, num_state_features), dtype=jnp.float32)
    out_big = jax.block_until_ready(
        agent_forward(x_big, kernel_params, num_actions=A))
    ref_big = _reference_forward(x_big, params)
    assert out_big.shape == (300, num_actions)
    assert jnp.allclose(out_big, ref_big, atol=1e-3, rtol=1e-3), (
        f"big-batch max abs err = {jnp.max(jnp.abs(out_big - ref_big))}")

    print("KERNEL_OK")
</pallas_src>

<mosaic_0001>
module attributes {stable_mosaic.version = 11 : i64} {
  func.func @_mlp_kernel(%arg0: i32, %arg1: memref<16x32xf32, #tpu.memory_space<vmem>>, %arg2: memref<32x128xbf16, #tpu.memory_space<vmem>>, %arg3: memref<1x128xf32, #tpu.memory_space<vmem>>, %arg4: memref<128x128xbf16, #tpu.memory_space<vmem>>, %arg5: memref<1x128xf32, #tpu.memory_space<vmem>>, %arg6: memref<128x128xbf16, #tpu.memory_space<vmem>>, %arg7: memref<1x128xf32, #tpu.memory_space<vmem>>, %arg8: memref<128x128xbf16, #tpu.memory_space<vmem>>, %arg9: memref<1x128xf32, #tpu.memory_space<vmem>>, %arg10: memref<16x4xf32, #tpu.memory_space<vmem>>) attributes {dimension_semantics = [#tpu.dimension_semantics<parallel>], iteration_bounds = array<i64: 1>, scalar_prefetch = 0 : i64, scratch_operands = 0 : i64, tpu.core_type = #tpu.core_type<tc>, window_params = [{transform_indices = @transform_0, window_bounds = array<i64: 16, 32>}, {pipeline_mode = #tpu.pipeline_mode<synchronous>, transform_indices = @transform_1, window_bounds = array<i64: 32, 128>}, {pipeline_mode = #tpu.pipeline_mode<synchronous>, transform_indices = @transform_2, window_bounds = array<i64: 1, 128>}, {pipeline_mode = #tpu.pipeline_mode<synchronous>, transform_indices = @transform_3, window_bounds = array<i64: 128, 128>}, {pipeline_mode = #tpu.pipeline_mode<synchronous>, transform_indices = @transform_4, window_bounds = array<i64: 1, 128>}, {pipeline_mode = #tpu.pipeline_mode<synchronous>, transform_indices = @transform_5, window_bounds = array<i64: 128, 128>}, {pipeline_mode = #tpu.pipeline_mode<synchronous>, transform_indices = @transform_6, window_bounds = array<i64: 1, 128>}, {pipeline_mode = #tpu.pipeline_mode<synchronous>, transform_indices = @transform_7, window_bounds = array<i64: 128, 128>}, {pipeline_mode = #tpu.pipeline_mode<synchronous>, transform_indices = @transform_8, window_bounds = array<i64: 1, 128>}, {transform_indices = @transform_9, window_bounds = array<i64: 16, 4>}]} {
    %c0 = arith.constant 0 : index
    %c0_0 = arith.constant 0 : index
    %0 = vector.load %arg1[%c0, %c0_0] : memref<16x32xf32, #tpu.memory_space<vmem>>, vector<16x32xf32>
    %1 = arith.truncf %0 : vector<16x32xf32> to vector<16x32xbf16>
    %c0_1 = arith.constant 0 : index
    %c0_2 = arith.constant 0 : index
    %2 = vector.load %arg2[%c0_1, %c0_2] : memref<32x128xbf16, #tpu.memory_space<vmem>>, vector<32x128xbf16>
    %cst = arith.constant dense<0.000000e+00> : vector<16x128xf32>
    %3 = tpu.matmul %1, %2, %cst {dimension_numbers = #tpu.dot_dimension_numbers<[1], [0], [0], [1], [0, 0, 1, 1], [], []>} : vector<16x32xbf16>, vector<32x128xbf16>, vector<16x128xf32> -> vector<16x128xf32>
    %c0_3 = arith.constant 0 : index
    %c0_4 = arith.constant 0 : index
    %4 = vector.load %arg3[%c0_3, %c0_4] : memref<1x128xf32, #tpu.memory_space<vmem>>, vector<1x128xf32>
    %5 = vector.broadcast %4 : vector<1x128xf32> to vector<16x128xf32>
    %6 = arith.addf %3, %5 : vector<16x128xf32>
    %cst_5 = arith.constant 0.000000e+00 : f32
    %7 = vector.broadcast %cst_5 : f32 to vector<16x128xf32>
    %8 = arith.maximumf %6, %7 : vector<16x128xf32>
    %9 = arith.truncf %8 : vector<16x128xf32> to vector<16x128xbf16>
    %c0_6 = arith.constant 0 : index
    %c0_7 = arith.constant 0 : index
    %10 = vector.load %arg4[%c0_6, %c0_7] : memref<128x128xbf16, #tpu.memory_space<vmem>>, vector<128x128xbf16>
    %cst_8 = arith.constant dense<0.000000e+00> : vector<16x128xf32>
    %11 = tpu.matmul %9, %10, %cst_8 {dimension_numbers = #tpu.dot_dimension_numbers<[1], [0], [0], [1], [0, 0, 1, 1], [], []>} : vector<16x128xbf16>, vector<128x128xbf16>, vector<16x128xf32> -> vector<16x128xf32>
    %c0_9 = arith.constant 0 : index
    %c0_10 = arith.constant 0 : index
    %12 = vector.load %arg5[%c0_9, %c0_10] : memref<1x128xf32, #tpu.memory_space<vmem>>, vector<1x128xf32>
    %13 = vector.broadcast %12 : vector<1x128xf32> to vector<16x128xf32>
    %14 = arith.addf %11, %13 : vector<16x128xf32>
    %cst_11 = arith.constant 0.000000e+00 : f32
    %15 = vector.broadcast %cst_11 : f32 to vector<16x128xf32>
    %16 = arith.maximumf %14, %15 : vector<16x128xf32>
    %17 = arith.truncf %16 : vector<16x128xf32> to vector<16x128xbf16>
    %c0_12 = arith.constant 0 : index
    %c0_13 = arith.constant 0 : index
    %18 = vector.load %arg6[%c0_12, %c0_13] : memref<128x128xbf16, #tpu.memory_space<vmem>>, vector<128x128xbf16>
    %cst_14 = arith.constant dense<0.000000e+00> : vector<16x128xf32>
    %19 = tpu.matmul %17, %18, %cst_14 {dimension_numbers = #tpu.dot_dimension_numbers<[1], [0], [0], [1], [0, 0, 1, 1], [], []>} : vector<16x128xbf16>, vector<128x128xbf16>, vector<16x128xf32> -> vector<16x128xf32>
    %c0_15 = arith.constant 0 : index
    %c0_16 = arith.constant 0 : index
    %20 = vector.load %arg7[%c0_15, %c0_16] : memref<1x128xf32, #tpu.memory_space<vmem>>, vector<1x128xf32>
    %21 = vector.broadcast %20 : vector<1x128xf32> to vector<16x128xf32>
    %22 = arith.addf %19, %21 : vector<16x128xf32>
    %cst_17 = arith.constant 0.000000e+00 : f32
    %23 = vector.broadcast %cst_17 : f32 to vector<16x128xf32>
    %24 = arith.maximumf %22, %23 : vector<16x128xf32>
    %25 = arith.truncf %24 : vector<16x128xf32> to vector<16x128xbf16>
    %c0_18 = arith.constant 0 : index
    %c0_19 = arith.constant 0 : index
    %26 = vector.load %arg8[%c0_18, %c0_19] : memref<128x128xbf16, #tpu.memory_space<vmem>>, vector<128x128xbf16>
    %cst_20 = arith.constant dense<0.000000e+00> : vector<16x128xf32>
    %27 = tpu.matmul %25, %26, %cst_20 {dimension_numbers = #tpu.dot_dimension_numbers<[1], [0], [0], [1], [0, 0, 1, 1], [], []>} : vector<16x128xbf16>, vector<128x128xbf16>, vector<16x128xf32> -> vector<16x128xf32>
    %c0_21 = arith.constant 0 : index
    %c0_22 = arith.constant 0 : index
    %28 = vector.load %arg9[%c0_21, %c0_22] : memref<1x128xf32, #tpu.memory_space<vmem>>, vector<1x128xf32>
    %29 = vector.broadcast %28 : vector<1x128xf32> to vector<16x128xf32>
    %30 = arith.addf %27, %29 : vector<16x128xf32>
    %31 = vector.extract_strided_slice %30 {offsets = [0, 0], sizes = [16, 4], strides = [1, 1]} : vector<16x128xf32> to vector<16x4xf32>
    %c0_23 = arith.constant 0 : index
    %c0_24 = arith.constant 0 : index
    %32 = vector.load %arg10[%c0_23, %c0_24] : memref<16x4xf32, #tpu.memory_space<vmem>>, vector<16x4xf32>
    tpu.vector_store %arg10[%c0_23, %c0_24], %31 {strides = array<i32>} : memref<16x4xf32, #tpu.memory_space<vmem>>, vector<16x4xf32>,
    return
  }
  func.func @transform_0(%arg0: i32) -> (i32, i32) {
    %c0_i32 = arith.constant 0 : i32
    %c0_i32_0 = arith.constant 0 : i32
    return %arg0, %c0_i32 : i32, i32
  }
  func.func @transform_1(%arg0: i32) -> (i32, i32) {
    %c0_i32 = arith.constant 0 : i32
    %c0_i32_0 = arith.constant 0 : i32
    %c0_i32_1 = arith.constant 0 : i32
    return %c0_i32, %c0_i32_0 : i32, i32
  }
  func.func @transform_2(%arg0: i32) -> (i32, i32) {
    %c0_i32 = arith.constant 0 : i32
    %c0_i32_0 = arith.constant 0 : i32
    %c0_i32_1 = arith.constant 0 : i32
    return %c0_i32, %c0_i32_0 : i32, i32
  }
  func.func @transform_3(%arg0: i32) -> (i32, i32) {
    %c0_i32 = arith.constant 0 : i32
    %c0_i32_0 = arith.constant 0 : i32
    %c0_i32_1 = arith.constant 0 : i32
    return %c0_i32, %c0_i32_0 : i32, i32
  }
  func.func @transform_4(%arg0: i32) -> (i32, i32) {
    %c0_i32 = arith.constant 0 : i32
    %c0_i32_0 = arith.constant 0 : i32
    %c0_i32_1 = arith.constant 0 : i32
    return %c0_i32, %c0_i32_0 : i32, i32
  }
  func.func @transform_5(%arg0: i32) -> (i32, i32) {
    %c0_i32 = arith.constant 0 : i32
    %c0_i32_0 = arith.constant 0 : i32
    %c0_i32_1 = arith.constant 0 : i32
    return %c0_i32, %c0_i32_0 : i32, i32
  }
  func.func @transform_6(%arg0: i32) -> (i32, i32) {
    %c0_i32 = arith.constant 0 : i32
    %c0_i32_0 = arith.constant 0 : i32
    %c0_i32_1 = arith.constant 0 : i32
    return %c0_i32, %c0_i32_0 : i32, i32
  }
  func.func @transform_7(%arg0: i32) -> (i32, i32) {
    %c0_i32 = arith.constant 0 : i32
    %c0_i32_0 = arith.constant 0 : i32
    %c0_i32_1 = arith.constant 0 : i32
    return %c0_i32, %c0_i32_0 : i32, i32
  }
  func.func @transform_8(%arg0: i32) -> (i32, i32) {
    %c0_i32 = arith.constant 0 : i32
    %c0_i32_0 = arith.constant 0 : i32
    %c0_i32_1 = arith.constant 0 : i32
    return %c0_i32, %c0_i32_0 : i32, i32
  }
  func.func @transform_9(%arg0: i32) -> (i32, i32) {
    %c0_i32 = arith.constant 0 : i32
    %c0_i32_0 = arith.constant 0 : i32
    return %arg0, %c0_i32 : i32, i32
  }
}

</mosaic_0001>

<llo_original>
// kernel: agent_forward.1
$region0: #{agent_forward.1}
  #allocation0 [shape = 'u32[]', space=smem, size = 0x4, offset = 0x4, fixed_abs, tag = 'smem constant byte address 0x4 - core index']
  #allocation1 [shape = 'u32[72,128]{1,0:T(1,128)}', space=vmem, size = 0x9000, scoped, tag = 'internal scratch']
  %s0 = inlined_call_operand.vmem [shape: f32[16,32], index: 0, kind: input, shape index: {}]
  %s1 = inlined_call_operand.vmem [shape: bf16[32,128], index: 1, kind: input, shape index: {}]
  %s2 = inlined_call_operand.vmem [shape: f32[1,128], index: 2, kind: input, shape index: {}]
  %s3 = inlined_call_operand.hbm [shape: bf16[128,128], index: 3, kind: input, shape index: {}]
  %s4 = inlined_call_operand.vmem [shape: f32[1,128], index: 4, kind: input, shape index: {}]
  %s5 = inlined_call_operand.hbm [shape: bf16[128,128], index: 5, kind: input, shape index: {}]
  %s6 = inlined_call_operand.vmem [shape: f32[1,128], index: 6, kind: input, shape index: {}]
  %s7 = inlined_call_operand.hbm [shape: bf16[128,128], index: 7, kind: input, shape index: {}]
  %s8 = inlined_call_operand.vmem [shape: f32[1,128], index: 8, kind: input, shape index: {}]
  %s9 = inlined_call_operand.vmem [shape: f32[16,4], index: 9, kind: output, shape index: {}]
  %s10 = sld [smem:[#allocation0]]
  $region58: #{agent_forward.1} parent=0
    _
  %s12 = ssub.s32 1, %s10
  %s13 = scalar_select 0, %s12, %s10
  $region1: #{agent_forward.1} parent=0
    #allocation2 [shape = 'u8[32768]{0}', space=vmem, size = 0x8000, scoped, tag = 'input window, operand 3, single buffered']
    #allocation3 [shape = 's32[1]{0}', space=sflag, size = 0x4, scoped, tag = 'scoped memory for agent_forward.1']
    #allocation4 [shape = 'u8[32768]{0}', space=vmem, size = 0x8000, scoped, tag = 'input window, operand 5, single buffered']
    #allocation5 [shape = 's32[1]{0}', space=sflag, size = 0x4, scoped, tag = 'scoped memory for agent_forward.1']
    #allocation6 [shape = 'u8[32768]{0}', space=vmem, size = 0x8000, scoped, tag = 'input window, operand 7, single buffered']
    %14 = vsyncpa [#allocation3], 0
    %15 = vsyncpa [#allocation5], 0
    // Predicated region
    $region2: #{agent_forward.1} parent=1 // pred_check
      _
    $region3: #{agent_forward.1} parent=1 // pred_check_branch
      %17 = sbr.rel (0) target = $region5
    $region4: #{agent_forward.1} parent=1 // pred_region
      _
    $region5: #{agent_forward.1} parent=1 // pred_fallthru
      _
    // Predicated region
    $region6: #{agent_forward.1} parent=1 // pred_check
      _
    $region7: #{agent_forward.1} parent=1 // pred_check_branch
      %19 = sbr.rel (0) target = $region9
    $region8: #{agent_forward.1} parent=1 // pred_region
      _
    $region9: #{agent_forward.1} parent=1 // pred_fallthru
      _
    // Predicated region
    $region10: #{agent_forward.1} parent=1 // pred_check
      _
    $region11: #{agent_forward.1} parent=1 // pred_check_branch
      %21 = sbr.rel (0) target = $region13
    $region12: #{agent_forward.1} parent=1 // pred_region
      _
    $region13: #{agent_forward.1} parent=1 // pred_fallthru
      _
    // Predicated region
    $region14: #{agent_forward.1} parent=1 // pred_check
      _
    $region15: #{agent_forward.1} parent=1 // pred_check_branch
      %23 = sbr.rel (0) target = $region17
    $region16: #{agent_forward.1} parent=1 // pred_region
      %25 = vsyncadd [#allocation3], 0
      %s26 = sshll.u32 %s3, 4
      %s27 = int_to_ptr.hbm [resolvable:$true] %s26
      %s28 = sshll.u32 [#allocation2], 4
      %s29 = int_to_ptr.vmem [resolvable:$true] %s28
      %34 = dma.hbm_to_vmem [thread:$0]  %s27, 1024, %s29, [#allocation3], 64, 64, 4
    $region17: #{agent_forward.1} parent=1 // pred_fallthru
      _
    // Predicated region
    $region18: #{agent_forward.1} parent=1 // pred_check
      _
    $region19: #{agent_forward.1} parent=1 // pred_check_branch
      %36 = sbr.rel (0) target = $region21
    $region20: #{agent_forward.1} parent=1 // pred_region
      _
    $region21: #{agent_forward.1} parent=1 // pred_fallthru
      _
    // Predicated region
    $region22: #{agent_forward.1} parent=1 // pred_check
      _
    $region23: #{agent_forward.1} parent=1 // pred_check_branch
      %38 = sbr.rel (0) target = $region25
    $region24: #{agent_forward.1} parent=1 // pred_region
      %40 = vsyncadd [#allocation5], 0
      %s41 = sshll.u32 %s5, 4
      %s42 = int_to_ptr.hbm [resolvable:$true] %s41
      %s43 = sshll.u32 [#allocation4], 4
      %s44 = int_to_ptr.vmem [resolvable:$true] %s43
      %49 = dma.hbm_to_vmem [thread:$0]  %s42, 1024, %s44, [#allocation5], 64, 64, 4
    $region25: #{agent_forward.1} parent=1 // pred_fallthru
      _
    // Predicated region
    $region26: #{agent_forward.1} parent=1 // pred_check
      _
    $region27: #{agent_forward.1} parent=1 // pred_check_branch
      %51 = sbr.rel (0) target = $region29
    $region28: #{agent_forward.1} parent=1 // pred_region
      _
    $region29: #{agent_forward.1} parent=1 // pred_fallthru
      _
    // Predicated region
    $region30: #{agent_forward.1} parent=1 // pred_check
      _
    $region31: #{agent_forward.1} parent=1 // pred_check_branch
      %53 = sbr.rel (0) target = $region33
    $region32: #{agent_forward.1} parent=1 // pred_region
      %55 = vsyncadd [#allocation5], 0
      %s56 = sshll.u32 %s7, 4
      %s57 = int_to_ptr.hbm [resolvable:$true] %s56
      %s58 = sshll.u32 [#allocation6], 4
      %s59 = int_to_ptr.vmem [resolvable:$true] %s58
      %64 = dma.hbm_to_vmem [thread:$0]  %s57, 1024, %s59, [#allocation5], 64, 64, 4
    $region33: #{agent_forward.1} parent=1 // pred_fallthru
      _
    // Predicated region
    $region34: #{agent_forward.1} parent=1 // pred_check
      _
    $region35: #{agent_forward.1} parent=1 // pred_check_branch
      %66 = sbr.rel (0) target = $region37
    $region36: #{agent_forward.1} parent=1 // pred_region
      _
    $region37: #{agent_forward.1} parent=1 // pred_fallthru
      _
    // Predicated region
    $region38: #{agent_forward.1} parent=1 // pred_check
      _
    $region39: #{agent_forward.1} parent=1 // pred_check_branch
      %68 = sbr.rel (0) target = $region41
    $region40: #{agent_forward.1} parent=1 // pred_region
      %70 = dma.done [#allocation3], 1024
    $region41: #{agent_forward.1} parent=1 // pred_fallthru
      _
    // Predicated region
    $region42: #{agent_forward.1} parent=1 // pred_check
      _
    $region43: #{agent_forward.1} parent=1 // pred_check_branch
      %72 = sbr.rel (0) target = $region45
    $region44: #{agent_forward.1} parent=1 // pred_region
      %74 = dma.done [#allocation5], 1024
    $region45: #{agent_forward.1} parent=1 // pred_fallthru
      _
    // Predicated region
    $region46: #{agent_forward.1} parent=1 // pred_check
      _
    $region47: #{agent_forward.1} parent=1 // pred_check_branch
      %76 = sbr.rel (0) target = $region49
    $region48: #{agent_forward.1} parent=1 // pred_region
      %78 = dma.done [#allocation5], 1024
    $region49: #{agent_forward.1} parent=1 // pred_fallthru
      _
    %v80 = vld [vmem:[%s0] sm:$0xff]
    %v81 = vld [vmem:[%s0 + $0x8] sm:$0xff]
    %v82 = vpack.c.bf16 %v81, %v80
    %v83 = vld [vmem:[%s1] sm:$0xf]
    %v84 = vld [vmem:[%s1 + $0x4] sm:$0xf]
    %v85 = vld [vmem:[%s1 + $0x8] sm:$0xf]
    %v86 = vld [vmem:[%s1 + $0xc] sm:$0xf]
    %v87 = vld [vmem:[%s2] sm:$0x1]
    %v89 = vperm.slane %v87, 0
    %v95 = vunpack.c.l.b16 %v83
    %v96 = vunpack.c.l.b16 %v84
    %v97 = vunpack.c.l.b16 %v85
    %v98 = vunpack.c.l.b16 %v86
    %v99 = vpack.c.b16 %v96, %v95
    %v100 = vpack.c.b16 %v98, %v97
    %vm103 = vcmask 261120
    %v105 = vsel %vm103, %v82, 0
    %107 = vmatpush.bf16.msra.mxu0 0
    %108 = vmatpush.bf16.msra.mxu0 0
    %109 = vmatpush.bf16.msra.mxu0 0
    %110 = vmatpush.bf16.msra.mxu0 0
    %111 = vmatpush.bf16.msra.mxu0 0
    %112 = vmatpush.bf16.msra.mxu0 0
    %113 = vmatpush.bf16.msra.mxu0 %v100
    %114 = vmatpush.bf16.msra.mxu0 %v99
    %115 = vmatmul.bf16.gmra.mxu0 %v105
    %v116 = vpop.f32.mrf.mxu0
    %v117 = vadd.f32 %v89, %v116
    %v118 = vpop.f32.mrf.mxu0
    %v119 = vadd.f32 %v89, %v118
    %120 = vdwg.mxu0
    %v121 = vmax.f32 %v117, 0.0
    %v122 = vmax.f32 %v119, 0.0
    %v123 = vpack.c.bf16 %v122, %v121
    %v124 = vld [vmem:[#allocation2] sm:$0xf]
    %v125 = vld [vmem:[#allocation2 + $0x4] sm:$0xf]
    %v126 = vld [vmem:[#allocation2 + $0x8] sm:$0xf]
    %v127 = vld [vmem:[#allocation2 + $0xc] sm:$0xf]
    %v128 = vld [vmem:[#allocation2 + $0x10] sm:$0xf]
    %v129 = vld [vmem:[#allocation2 + $0x14] sm:$0xf]
    %v130 = vld [vmem:[#allocation2 + $0x18] sm:$0xf]
    %v131 = vld [vmem:[#allocation2 + $0x1c] sm:$0xf]
    %v132 = vld [vmem:[#allocation2 + $0x20] sm:$0xf]
    %v133 = vld [vmem:[#allocation2 + $0x24] sm:$0xf]
    %v134 = vld [vmem:[#allocation2 + $0x28] sm:$0xf]
    %v135 = vld [vmem:[#allocation2 + $0x2c] sm:$0xf]
    %v136 = vld [vmem:[#allocation2 + $0x30] sm:$0xf]
    %v137 = vld [vmem:[#allocation2 + $0x34] sm:$0xf]
    %v138 = vld [vmem:[#allocation2 + $0x38] sm:$0xf]
    %v139 = vld [vmem:[#allocation2 + $0x3c] sm:$0xf]
    %v140 = vld [vmem:[%s4] sm:$0x1]
    %v142 = vperm.slane %v140, 0
    %v160 = vunpack.c.l.b16 %v124
    %v161 = vunpack.c.l.b16 %v125
    %v162 = vunpack.c.l.b16 %v126
    %v163 = vunpack.c.l.b16 %v127
    %v164 = vunpack.c.l.b16 %v128
    %v165 = vunpack.c.l.b16 %v129
    %v166 = vunpack.c.l.b16 %v130
    %v167 = vunpack.c.l.b16 %v131
    %v168 = vunpack.c.l.b16 %v132
    %v169 = vunpack.c.l.b16 %v133
    %v170 = vunpack.c.l.b16 %v134
    %v171 = vunpack.c.l.b16 %v135
    %v172 = vunpack.c.l.b16 %v136
    %v173 = vunpack.c.l.b16 %v137
    %v174 = vunpack.c.l.b16 %v138
    %v175 = vunpack.c.l.b16 %v139
    %v176 = vpack.c.b16 %v161, %v160
    %v177 = vpack.c.b16 %v163, %v162
    %v178 = vpack.c.b16 %v165, %v164
    %v179 = vpack.c.b16 %v167, %v166
    %v180 = vpack.c.b16 %v169, %v168
    %v181 = vpack.c.b16 %v171, %v170
    %v182 = vpack.c.b16 %v173, %v172
    %v183 = vpack.c.b16 %v175, %v174
    %192 = vmatpush.bf16.msra.mxu0 %v183
    %193 = vmatpush.bf16.msra.mxu0 %v182
    %194 = vmatpush.bf16.msra.mxu0 %v181
    %195 = vmatpush.bf16.msra.mxu0 %v180
    %196 = vmatpush.bf16.msra.mxu0 %v179
    %197 = vmatpush.bf16.msra.mxu0 %v178
    %198 = vmatpush.bf16.msra.mxu0 %v177
    %199 = vmatpush.bf16.msra.mxu0 %v176
    %200 = vmatmul.bf16.gmra.mxu0 %v123
    %v201 = vpop.f32.mrf.mxu0
    %v202 = vadd.f32 %v142, %v201
    %v203 = vpop.f32.mrf.mxu0
    %v204 = vadd.f32 %v142, %v203
    %205 = vdwg.mxu0
    %v206 = vmax.f32 %v202, 0.0
    %v207 = vmax.f32 %v204, 0.0
    %v208 = vpack.c.bf16 %v207, %v206
    %v209 = vld [vmem:[#allocation4] sm:$0xf]
    %v210 = vld [vmem:[#allocation4 + $0x4] sm:$0xf]
    %v211 = vld [vmem:[#allocation4 + $0x8] sm:$0xf]
    %v212 = vld [vmem:[#allocation4 + $0xc] sm:$0xf]
    %v213 = vld [vmem:[#allocation4 + $0x10] sm:$0xf]
    %v214 = vld [vmem:[#allocation4 + $0x14] sm:$0xf]
    %v215 = vld [vmem:[#allocation4 + $0x18] sm:$0xf]
    %v216 = vld [vmem:[#allocation4 + $0x1c] sm:$0xf]
    %v217 = vld [vmem:[#allocation4 + $0x20] sm:$0xf]
    %v218 = vld [vmem:[#allocation4 + $0x24] sm:$0xf]
    %v219 = vld [vmem:[#allocation4 + $0x28] sm:$0xf]
    %v220 = vld [vmem:[#allocation4 + $0x2c] sm:$0xf]
    %v221 = vld [vmem:[#allocation4 + $0x30] sm:$0xf]
    %v222 = vld [vmem:[#allocation4 + $0x34] sm:$0xf]
    %v223 = vld [vmem:[#allocation4 + $0x38] sm:$0xf]
    %v224 = vld [vmem:[#allocation4 + $0x3c] sm:$0xf]
    %v225 = vld [vmem:[%s6] sm:$0x1]
    %v227 = vperm.slane %v225, 0
    %v245 = vunpack.c.l.b16 %v209
    %v246 = vunpack.c.l.b16 %v210
    %v247 = vunpack.c.l.b16 %v211
    %v248 = vunpack.c.l.b16 %v212
    %v249 = vunpack.c.l.b16 %v213
    %v250 = vunpack.c.l.b16 %v214
    %v251 = vunpack.c.l.b16 %v215
    %v252 = vunpack.c.l.b16 %v216
    %v253 = vunpack.c.l.b16 %v217
    %v254 = vunpack.c.l.b16 %v218
    %v255 = vunpack.c.l.b16 %v219
    %v256 = vunpack.c.l.b16 %v220
    %v257 = vunpack.c.l.b16 %v221
    %v258 = vunpack.c.l.b16 %v222
    %v259 = vunpack.c.l.b16 %v223
    %v260 = vunpack.c.l.b16 %v224
    %v261 = vpack.c.b16 %v246, %v245
    %v262 = vpack.c.b16 %v248, %v247
    %v263 = vpack.c.b16 %v250, %v249
    %v264 = vpack.c.b16 %v252, %v251
    %v265 = vpack.c.b16 %v254, %v253
    %v266 = vpack.c.b16 %v256, %v255
    %v267 = vpack.c.b16 %v258, %v257
    %v268 = vpack.c.b16 %v260, %v259
    %277 = vmatpush.bf16.msra.mxu0 %v268
    %278 = vmatpush.bf16.msra.mxu0 %v267
    %279 = vmatpush.bf16.msra.mxu0 %v266
    %280 = vmatpush.bf16.msra.mxu0 %v265
    %281 = vmatpush.bf16.msra.mxu0 %v264
    %282 = vmatpush.bf16.msra.mxu0 %v263
    %283 = vmatpush.bf16.msra.mxu0 %v262
    %284 = vmatpush.bf16.msra.mxu0 %v261
    %285 = vmatmul.bf16.gmra.mxu0 %v208
    %v286 = vpop.f32.mrf.mxu0
    %v287 = vadd.f32 %v227, %v286
    %v288 = vpop.f32.mrf.mxu0
    %v289 = vadd.f32 %v227, %v288
    %290 = vdwg.mxu0
    %v291 = vmax.f32 %v287, 0.0
    %v292 = vmax.f32 %v289, 0.0
    %v293 = vpack.c.bf16 %v292, %v291
    %v294 = vld [vmem:[#allocation6] sm:$0xf]
    %v295 = vld [vmem:[#allocation6 + $0x4] sm:$0xf]
    %v296 = vld [vmem:[#allocation6 + $0x8] sm:$0xf]
    %v297 = vld [vmem:[#allocation6 + $0xc] sm:$0xf]
    %v298 = vld [vmem:[#allocation6 + $0x10] sm:$0xf]
    %v299 = vld [vmem:[#allocation6 + $0x14] sm:$0xf]
    %v300 = vld [vmem:[#allocation6 + $0x18] sm:$0xf]
    %v301 = vld [vmem:[#allocation6 + $0x1c] sm:$0xf]
    %v302 = vld [vmem:[#allocation6 + $0x20] sm:$0xf]
    %v303 = vld [vmem:[#allocation6 + $0x24] sm:$0xf]
    %v304 = vld [vmem:[#allocation6 + $0x28] sm:$0xf]
    %v305 = vld [vmem:[#allocation6 + $0x2c] sm:$0xf]
    %v306 = vld [vmem:[#allocation6 + $0x30] sm:$0xf]
    %v307 = vld [vmem:[#allocation6 + $0x34] sm:$0xf]
    %v308 = vld [vmem:[#allocation6 + $0x38] sm:$0xf]
    %v309 = vld [vmem:[#allocation6 + $0x3c] sm:$0xf]
    %v310 = vld [vmem:[%s8] sm:$0x1]
    %v312 = vperm.slane %v310, 0
    %v330 = vunpack.c.l.b16 %v294
    %v331 = vunpack.c.l.b16 %v295
    %v332 = vunpack.c.l.b16 %v296
    %v333 = vunpack.c.l.b16 %v297
    %v334 = vunpack.c.l.b16 %v298
    %v335 = vunpack.c.l.b16 %v299
    %v336 = vunpack.c.l.b16 %v300
    %v337 = vunpack.c.l.b16 %v301
    %v338 = vunpack.c.l.b16 %v302
    %v339 = vunpack.c.l.b16 %v303
    %v340 = vunpack.c.l.b16 %v304
    %v341 = vunpack.c.l.b16 %v305
    %v342 = vunpack.c.l.b16 %v306
    %v343 = vunpack.c.l.b16 %v307
    %v344 = vunpack.c.l.b16 %v308
    %v345 = vunpack.c.l.b16 %v309
    %v346 = vpack.c.b16 %v331, %v330
    %v347 = vpack.c.b16 %v333, %v332
    %v348 = vpack.c.b16 %v335, %v334
    %v349 = vpack.c.b16 %v337, %v336
    %v350 = vpack.c.b16 %v339, %v338
    %v351 = vpack.c.b16 %v341, %v340
    %v352 = vpack.c.b16 %v343, %v342
    %v353 = vpack.c.b16 %v345, %v344
    %362 = vmatpush.bf16.msra.mxu0 %v353
    %363 = vmatpush.bf16.msra.mxu0 %v352
    %364 = vmatpush.bf16.msra.mxu0 %v351
    %365 = vmatpush.bf16.msra.mxu0 %v350
    %366 = vmatpush.bf16.msra.mxu0 %v349
    %367 = vmatpush.bf16.msra.mxu0 %v348
    %368 = vmatpush.bf16.msra.mxu0 %v347
    %369 = vmatpush.bf16.msra.mxu0 %v346
    %370 = vmatmul.bf16.gmra.mxu0 %v293
    %v371 = vpop.f32.mrf.mxu0
    %v372 = vadd.f32 %v312, %v371
    %v373 = vpop.f32.mrf.mxu0
    %v374 = vadd.f32 %v312, %v373
    %375 = vdwg.mxu0
    %vm376 = vcmask 31744
    %377 = vst.msk [vmem:[%s9] sm:$0xff] %vm376, %v372
    %378 = vst.msk [vmem:[%s9 + $0x8] sm:$0xff] %vm376, %v374
    // Predicated region
    $region50: #{agent_forward.1} parent=1 // pred_check
      _
    $region51: #{agent_forward.1} parent=1 // pred_check_branch
      %380 = sbr.rel (0) target = $region53
    $region52: #{agent_forward.1} parent=1 // pred_region
      _
    $region53: #{agent_forward.1} parent=1 // pred_fallthru
      _
    // Predicated region
    $region54: #{agent_forward.1} parent=1 // pred_check
      _
    $region55: #{agent_forward.1} parent=1 // pred_check_branch
      %382 = sbr.rel (0) target = $region57
    $region56: #{agent_forward.1} parent=1 // pred_region
      _
    $region57: #{agent_forward.1} parent=1 // pred_fallthru
      _
    %383 = vsyncpa [#allocation3], 1
    %384 = vsyncpa [#allocation5], 1

</llo_original>
